<compile_context>
chip_gen: v7x
topology: tpu7x:2x2x1
jax: 0.10.0
libtpu: 0.0.40
codegen_flags: <defaults>
</compile_context>

<pallas_src>
import jax
import jax.numpy as jnp
from jax import lax
from jax.experimental import pallas as pl
from jax.experimental.pallas import tpu as pltpu


def _pick_t_tile(T, D, vmem_budget_bytes=4 << 20, cap_rows=2048):
    """T-tile: multiple of 16 (bf16 packs 16 sublanes), <= ~4 MiB of bf16 per
    block, capped at 2048 rows.  Remainder rows are masked in-kernel."""
    budget_rows = vmem_budget_bytes // (2 * D)          # bf16 = 2 B/elem
    cap = max(16, min(cap_rows, budget_rows))
    cap -= cap % 16
    if T <= cap:
        if T < 16 or T % 16 == 0:
            return T                                    # full axis (always legal)
        return (T // 16) * 16                           # last partial block masked
    return cap


def sentiment_classifier_forward(features, w1, b1, w2, b2):
    """features: (B, T, D).  w1: (D, H), b1: (1, H), w2: (O, H), b2: (1, O).

    Returns softmax probabilities (O,), matching the PyTorch module.
    """
    B, T, D = features.shape
    H = w1.shape[1]
    O = w2.shape[0]

    # bf16 for the streamed tensors (halves HBM->VMEM bytes); biases stay f32.
    features = features.astype(jnp.bfloat16)
    w1 = w1.astype(jnp.bfloat16)
    w2 = w2.astype(jnp.bfloat16)
    b1 = b1.astype(jnp.float32).reshape(1, H)
    b2 = b2.astype(jnp.float32).reshape(1, O)

    tT = _pick_t_tile(T, D)
    grid_t = pl.cdiv(T, tT)
    use_fold = (tT % 8 == 0)       # (tT/8, 8, D) VPU fold path
    needs_mask = (T % tT != 0)     # trailing partial block must be masked
    acc_rows = 8 if use_fold else 1

    def kernel(feat_ref, w1_ref, b1_ref, w2_ref, b2_ref, out_ref, acc_ref):
        # feat_ref: (1, tT, D) bf16  -- batch row 0 only, T tiled on the grid
        # w1_ref:   (D, H) bf16      b1_ref: (1, H) f32
        # w2_ref:   (O, H) bf16      b2_ref: (1, O) f32
        # out_ref:  (1, O) f32       acc_ref: (acc_rows, D) f32 scratch
        t = pl.program_id(0)

        @pl.when(t == 0)
        def _init():
            acc_ref[...] = jnp.zeros_like(acc_ref)

        # torch.sum(features, dim=1) contribution of this T-tile, f32 accumulate.
        # TODO(synk): on v5e a ones-row matvec on the MXU may beat this VPU fold
        # (no bf16 VPU there); keep the VPU fold as the portable default.
        f = feat_ref[0].astype(jnp.float32)                          # (tT, D)
        if needs_mask:
            valid = T - t * tT                                       # rows in-bounds
            row = lax.broadcasted_iota(jnp.int32, (tT, D), 0)
            f = jnp.where(row < valid, f, 0.0)                       # zero OOB rows
        if use_fold:
            # Fold onto 8 sublanes with plain cross-vreg adds; the single
            # cross-sublane (XLU) reduce happens once, in _finalize.
            acc_ref[...] += jnp.sum(f.reshape(tT // 8, 8, D), axis=0)   # (8, D)
        else:
            acc_ref[...] += jnp.sum(f, axis=0, keepdims=True)           # (1, D)

        @pl.when(t == pl.num_programs(0) - 1)
        def _finalize():
            x32 = jnp.sum(acc_ref[...], axis=0, keepdims=True)       # (1, D)
            x = x32.astype(jnp.bfloat16)

            # Linear(D, 512) + ReLU   (bf16 inputs, f32 accumulate)
            h = jnp.dot(x, w1_ref[...],
                        preferred_element_type=jnp.float32) + b1_ref[...]   # (1, H)
            h = jnp.maximum(h, 0.0)

            # Linear(512, O): w2 is lane-dense (O, H); contract over H ("NT").
            logits = lax.dot_general(
                h.astype(jnp.bfloat16), w2_ref[...],
                dimension_numbers=(((1,), (1,)), ((), ())),
                preferred_element_type=jnp.float32) + b2_ref[...]           # (1, O)

            # torch.softmax(logits, dim=0): exact normalization (runs once on
            # a (1, O) vector; approx reciprocal only sums to 1 within ~1e-3).
            m = jnp.max(logits, axis=-1, keepdims=True)
            e = jnp.exp(logits - m)
            denom = jnp.sum(e, axis=-1, keepdims=True)
            out_ref[...] = (e / denom).astype(out_ref.dtype)

    cost = pl.CostEstimate(
        flops=2 * T * D + 2 * D * H + 2 * H * O,
        transcendentals=O,
        bytes_accessed=T * D * 2 + D * H * 2 + O * H * 2 + (H + 2 * O) * 4,
    )

    out = pl.pallas_call(
        kernel,
        out_shape=jax.ShapeDtypeStruct((1, O), jnp.float32),
        grid_spec=pltpu.PrefetchScalarGridSpec(
            num_scalar_prefetch=0,
            grid=(grid_t,),
            in_specs=[
                # Only batch row 0 is ever used -> never DMA rows 1..B-1.
                pl.BlockSpec((1, tT, D), lambda t: (0, t, 0)),
                # Constant-index weights/biases stay VMEM-resident across the
                # grid.  (On v7x, pipeline_mode=pl.Buffered(1) on these specs
                # would trim their double-buffer VMEM; omitted for maximum
                # portability of the lowering/interpret path.)
                pl.BlockSpec((D, H), lambda t: (0, 0)),
                pl.BlockSpec((1, H), lambda t: (0, 0)),
                pl.BlockSpec((O, H), lambda t: (0, 0)),
                pl.BlockSpec((1, O), lambda t: (0, 0)),
            ],
            out_specs=pl.BlockSpec((1, O), lambda t: (0, 0)),
            scratch_shapes=[pltpu.VMEM((acc_rows, D), jnp.float32)],
        ),
        # T is a reduction (accumulator) axis -> "arbitrary".  No megacore
        # split: the kernel is HBM-stream-bound and TCs share chip HBM.
        compiler_params=pltpu.CompilerParams(
            dimension_semantics=("arbitrary",)),
        cost_estimate=cost,
    )(features, w1, b1, w2, b2)
    return out[0]  # (O,), matches torch 1-D output


def reference_forward(features, w1, b1, w2, b2):
    """Pure-JAX reference mirroring the kernel's bf16-input / f32-accumulate path."""
    f32 = jnp.float32
    feat = features.astype(jnp.bfloat16).astype(f32)
    summed = jnp.sum(feat, axis=1)                       # (B, D)
    x = summed[0].astype(jnp.bfloat16).astype(f32)       # (D,)
    w1f = w1.astype(jnp.bfloat16).astype(f32)
    w2f = w2.astype(jnp.bfloat16).astype(f32)
    h = jnp.maximum(x @ w1f + b1.reshape(-1), 0.0)       # (H,)
    hh = h.astype(jnp.bfloat16).astype(f32)
    logits = hh @ w2f.T + b2.reshape(-1)                 # (O,)
    return jax.nn.softmax(logits, axis=0)


if __name__ == "__main__":
    # Small shapes consistent with the module's forward:
    # batch=2, tokens=8, input_dim=32, hidden=512 (fixed by the module), output_dim=8
    B, T, D, H, O = 2, 8, 32, 512, 8

    key = jax.random.PRNGKey(0)
    k_feat, k_w1, k_b1, k_w2, k_b2 = jax.random.split(key, 5)

    features = jax.random.normal(k_feat, (B, T, D), dtype=jnp.float32)
    # Deterministic parameter init (stand-in for nn.Linear init).
    # w1 stored as (in, out); w2 stored lane-dense as (out, in) = PyTorch layout.
    w1 = jax.random.normal(k_w1, (D, H), dtype=jnp.float32) * (1.0 / jnp.sqrt(D))
    b1 = jax.random.normal(k_b1, (1, H), dtype=jnp.float32) * 0.01
    w2 = jax.random.normal(k_w2, (O, H), dtype=jnp.float32) * (1.0 / jnp.sqrt(H))
    b2 = jax.random.normal(k_b2, (1, O), dtype=jnp.float32) * 0.01

    out = sentiment_classifier_forward(features, w1, b1, w2, b2)
    out = jax.block_until_ready(out)

    ref = reference_forward(features, w1, b1, w2, b2)
    assert out.shape == (O,)
    assert jnp.allclose(jnp.sum(out), 1.0, atol=1e-3), jnp.sum(out)
    assert jnp.allclose(out, ref, atol=2e-4, rtol=1e-3), (out, ref)

    print("KERNEL_OK")
</pallas_src>

<mosaic_0001>
module attributes {stable_mosaic.version = 11 : i64} {
  func.func @kernel(%arg0: i32, %arg1: memref<1x8x32xbf16, #tpu.memory_space<vmem>>, %arg2: memref<32x512xbf16, #tpu.memory_space<vmem>>, %arg3: memref<1x512xf32, #tpu.memory_space<vmem>>, %arg4: memref<8x512xbf16, #tpu.memory_space<vmem>>, %arg5: memref<1x8xf32, #tpu.memory_space<vmem>>, %arg6: memref<1x8xf32, #tpu.memory_space<vmem>>, %arg7: memref<8x32xf32, #tpu.memory_space<vmem>>) attributes {dimension_semantics = [#tpu.dimension_semantics<arbitrary>], iteration_bounds = array<i64: 1>, scalar_prefetch = 0 : i64, scratch_operands = 1 : i64, tpu.core_type = #tpu.core_type<tc>, window_params = [{transform_indices = @transform_0, window_bounds = array<i64: 1, 8, 32>}, {pipeline_mode = #tpu.pipeline_mode<synchronous>, transform_indices = @transform_1, window_bounds = array<i64: 32, 512>}, {pipeline_mode = #tpu.pipeline_mode<synchronous>, transform_indices = @transform_2, window_bounds = array<i64: 1, 512>}, {pipeline_mode = #tpu.pipeline_mode<synchronous>, transform_indices = @transform_3, window_bounds = array<i64: 8, 512>}, {pipeline_mode = #tpu.pipeline_mode<synchronous>, transform_indices = @transform_4, window_bounds = array<i64: 1, 8>}, {pipeline_mode = #tpu.pipeline_mode<synchronous>, transform_indices = @transform_5, window_bounds = array<i64: 1, 8>}]} {
    %c0_i32 = arith.constant 0 : i32
    %0 = arith.cmpi eq, %arg0, %c0_i32 : i32
    %1 = arith.extui %0 : i1 to i32
    %c0_i32_0 = arith.constant 0 : i32
    %2 = arith.cmpi ne, %1, %c0_i32_0 : i32
    scf.if %2 {
      %cst_9 = arith.constant 0.000000e+00 : f32
      %14 = vector.broadcast %cst_9 : f32 to vector<8x32xf32>
      %c0_10 = arith.constant 0 : index
      %c0_11 = arith.constant 0 : index
      %15 = vector.load %arg7[%c0_10, %c0_11] : memref<8x32xf32, #tpu.memory_space<vmem>>, vector<8x32xf32>
      tpu.vector_store %arg7[%c0_10, %c0_11], %14 {strides = array<i32>} : memref<8x32xf32, #tpu.memory_space<vmem>>, vector<8x32xf32>,
    } else {
    }
    %c0 = arith.constant 0 : index
    %c0_1 = arith.constant 0 : index
    %c0_2 = arith.constant 0 : index
    %3 = vector.load %arg1[%c0, %c0_1, %c0_2] : memref<1x8x32xbf16, #tpu.memory_space<vmem>>, vector<1x8x32xbf16>
    %4 = vector.shape_cast %3 : vector<1x8x32xbf16> to vector<8x32xbf16>
    %5 = arith.extf %4 : vector<8x32xbf16> to vector<8x32xf32>
    %c0_3 = arith.constant 0 : index
    %c0_4 = arith.constant 0 : index
    %6 = vector.load %arg7[%c0_3, %c0_4] : memref<8x32xf32, #tpu.memory_space<vmem>>, vector<8x32xf32>
    %7 = vector.shape_cast %5 : vector<8x32xf32> to vector<1x8x32xf32>
    %cst = arith.constant dense<0.000000e+00> : vector<8x32xf32>
    %8 = vector.multi_reduction <add>, %7, %cst [0] : vector<1x8x32xf32> to vector<8x32xf32>
    %9 = arith.addf %6, %8 : vector<8x32xf32>
    %c0_5 = arith.constant 0 : index
    %c0_6 = arith.constant 0 : index
    %10 = vector.load %arg7[%c0_5, %c0_6] : memref<8x32xf32, #tpu.memory_space<vmem>>, vector<8x32xf32>
    tpu.vector_store %arg7[%c0_5, %c0_6], %9 {strides = array<i32>} : memref<8x32xf32, #tpu.memory_space<vmem>>, vector<8x32xf32>,
    %c0_i32_7 = arith.constant 0 : i32
    %11 = arith.cmpi eq, %arg0, %c0_i32_7 : i32
    %12 = arith.extui %11 : i1 to i32
    %c0_i32_8 = arith.constant 0 : i32
    %13 = arith.cmpi ne, %12, %c0_i32_8 : i32
    scf.if %13 {
      %c0_9 = arith.constant 0 : index
      %c0_10 = arith.constant 0 : index
      %14 = vector.load %arg7[%c0_9, %c0_10] : memref<8x32xf32, #tpu.memory_space<vmem>>, vector<8x32xf32>
      %cst_11 = arith.constant dense<0.000000e+00> : vector<32xf32>
      %15 = vector.multi_reduction <add>, %14, %cst_11 [0] : vector<8x32xf32> to vector<32xf32>
      %16 = vector.shape_cast %15 : vector<32xf32> to vector<1x32xf32>
      %17 = arith.truncf %16 : vector<1x32xf32> to vector<1x32xbf16>
      %c0_12 = arith.constant 0 : index
      %c0_13 = arith.constant 0 : index
      %18 = vector.load %arg2[%c0_12, %c0_13] : memref<32x512xbf16, #tpu.memory_space<vmem>>, vector<32x512xbf16>
      %cst_14 = arith.constant dense<0.000000e+00> : vector<1x512xf32>
      %19 = tpu.matmul %17, %18, %cst_14 {dimension_numbers = #tpu.dot_dimension_numbers<[1], [0], [0], [1], [0, 0, 1, 1], [], []>} : vector<1x32xbf16>, vector<32x512xbf16>, vector<1x512xf32> -> vector<1x512xf32>
      %c0_15 = arith.constant 0 : index
      %c0_16 = arith.constant 0 : index
      %20 = vector.load %arg3[%c0_15, %c0_16] : memref<1x512xf32, #tpu.memory_space<vmem>>, vector<1x512xf32>
      %21 = arith.addf %19, %20 : vector<1x512xf32>
      %cst_17 = arith.constant 0.000000e+00 : f32
      %22 = vector.broadcast %cst_17 : f32 to vector<1x512xf32>
      %23 = arith.maximumf %21, %22 : vector<1x512xf32>
      %24 = arith.truncf %23 : vector<1x512xf32> to vector<1x512xbf16>
      %c0_18 = arith.constant 0 : index
      %c0_19 = arith.constant 0 : index
      %25 = vector.load %arg4[%c0_18, %c0_19] : memref<8x512xbf16, #tpu.memory_space<vmem>>, vector<8x512xbf16>
      %cst_20 = arith.constant dense<0.000000e+00> : vector<1x8xf32>
      %26 = tpu.matmul %24, %25, %cst_20 {dimension_numbers = #tpu.dot_dimension_numbers<[1], [1], [0], [0], [0, 0, 1, 0], [], []>} : vector<1x512xbf16>, vector<8x512xbf16>, vector<1x8xf32> -> vector<1x8xf32>
      %c0_21 = arith.constant 0 : index
      %c0_22 = arith.constant 0 : index
      %27 = vector.load %arg5[%c0_21, %c0_22] : memref<1x8xf32, #tpu.memory_space<vmem>>, vector<1x8xf32>
      %28 = arith.addf %26, %27 : vector<1x8xf32>
      %cst_23 = arith.constant dense<0xFF800000> : vector<1xf32>
      %29 = vector.multi_reduction <maximumf>, %28, %cst_23 [1] : vector<1x8xf32> to vector<1xf32>
      %30 = vector.shape_cast %29 : vector<1xf32> to vector<1x1xf32>
      %31 = vector.broadcast %30 : vector<1x1xf32> to vector<1x8xf32>
      %32 = arith.subf %28, %31 : vector<1x8xf32>
      %33 = math.exp %32 : vector<1x8xf32>
      %cst_24 = arith.constant dense<0.000000e+00> : vector<1xf32>
      %34 = vector.multi_reduction <add>, %33, %cst_24 [1] : vector<1x8xf32> to vector<1xf32>
      %35 = vector.shape_cast %34 : vector<1xf32> to vector<1x1xf32>
      %36 = vector.broadcast %35 : vector<1x1xf32> to vector<1x8xf32>
      %37 = arith.divf %33, %36 : vector<1x8xf32>
      %c0_25 = arith.constant 0 : index
      %c0_26 = arith.constant 0 : index
      %38 = vector.load %arg6[%c0_25, %c0_26] : memref<1x8xf32, #tpu.memory_space<vmem>>, vector<1x8xf32>
      tpu.vector_store %arg6[%c0_25, %c0_26], %37 {strides = array<i32>} : memref<1x8xf32, #tpu.memory_space<vmem>>, vector<1x8xf32>,
    } else {
    }
    return
  }
  func.func @transform_0(%arg0: i32) -> (i32, i32, i32) {
    %c0_i32 = arith.constant 0 : i32
    %c0_i32_0 = arith.constant 0 : i32
    %c0_i32_1 = arith.constant 0 : i32
    return %c0_i32, %arg0, %c0_i32_0 : i32, i32, i32
  }
  func.func @transform_1(%arg0: i32) -> (i32, i32) {
    %c0_i32 = arith.constant 0 : i32
    %c0_i32_0 = arith.constant 0 : i32
    %c0_i32_1 = arith.constant 0 : i32
    return %c0_i32, %c0_i32_0 : i32, i32
  }
  func.func @transform_2(%arg0: i32) -> (i32, i32) {
    %c0_i32 = arith.constant 0 : i32
    %c0_i32_0 = arith.constant 0 : i32
    %c0_i32_1 = arith.constant 0 : i32
    return %c0_i32, %c0_i32_0 : i32, i32
  }
  func.func @transform_3(%arg0: i32) -> (i32, i32) {
    %c0_i32 = arith.constant 0 : i32
    %c0_i32_0 = arith.constant 0 : i32
    %c0_i32_1 = arith.constant 0 : i32
    return %c0_i32, %c0_i32_0 : i32, i32
  }
  func.func @transform_4(%arg0: i32) -> (i32, i32) {
    %c0_i32 = arith.constant 0 : i32
    %c0_i32_0 = arith.constant 0 : i32
    %c0_i32_1 = arith.constant 0 : i32
    return %c0_i32, %c0_i32_0 : i32, i32
  }
  func.func @transform_5(%arg0: i32) -> (i32, i32) {
    %c0_i32 = arith.constant 0 : i32
    %c0_i32_0 = arith.constant 0 : i32
    %c0_i32_1 = arith.constant 0 : i32
    return %c0_i32, %c0_i32_0 : i32, i32
  }
}

</mosaic_0001>

<llo_original>
// kernel: tpu_custom_call.1
$region0: #{tpu_custom_call.1}
  #allocation0 [shape = 'u32[]', space=smem, size = 0x4, offset = 0x4, fixed_abs, tag = 'smem constant byte address 0x4 - core index']
  #allocation1 [shape = 'u32[144,128]{1,0:T(1,128)}', space=vmem, size = 0x12000, scoped, tag = 'internal scratch']
  #allocation2 [shape = 'f32[8,32]{1,0:T(8,128)}', space=vmem, size = 0x1000, scoped, tag = 'scratch operand']
  %s0 = inlined_call_operand.hbm [shape: bf16[2,8,32], index: 0, kind: input, shape index: {}]
  %s1 = inlined_call_operand.hbm [shape: bf16[32,512], index: 1, kind: input, shape index: {}]
  %s2 = inlined_call_operand.vmem [shape: f32[1,512], index: 2, kind: input, shape index: {}]
  %s3 = inlined_call_operand.hbm [shape: bf16[8,512], index: 3, kind: input, shape index: {}]
  %s4 = inlined_call_operand.vmem [shape: f32[1,8], index: 4, kind: input, shape index: {}]
  %s5 = inlined_call_operand.hbm [shape: f32[1,8], index: 5, kind: output, shape index: {}]
  %s6 = sld [smem:[#allocation0]]
  $region50: #{tpu_custom_call.1} parent=0
    _
  %s8 = ssub.s32 1, %s6
  %s9 = scalar_select 0, %s8, %s6
  $region1: #{tpu_custom_call.1} parent=0
    #allocation3 [shape = 'u8[2048]{0}', space=vmem, size = 0x800, scoped, tag = 'input window, operand 0, single buffered']
    #allocation4 [shape = 's32[1]{0}', space=sflag, size = 0x4, scoped, tag = 'scoped memory for tpu_custom_call.1']
    #allocation5 [shape = 's32[1]{0}', space=sflag, size = 0x4, scoped, tag = 'scoped memory for tpu_custom_call.1']
    #allocation6 [shape = 'u8[32768]{0}', space=vmem, size = 0x8000, scoped, tag = 'input window, operand 1, single buffered']
    #allocation7 [shape = 's32[1]{0}', space=sflag, size = 0x4, scoped, tag = 'scoped memory for tpu_custom_call.1']
    #allocation8 [shape = 'u8[8192]{0}', space=vmem, size = 0x2000, scoped, tag = 'input window, operand 3, single buffered']
    #allocation9 [shape = 'u8[512]{0}', space=vmem, size = 0x400, scoped, tag = 'output window, operand 0, single buffered']
    %10 = vsyncpa [#allocation4], 0
    %11 = vsyncpa [#allocation7], 0
    %12 = vsyncpa [#allocation5], 0
    // Predicated region
    $region2: #{tpu_custom_call.1} parent=1 // pred_check
      _
    $region3: #{tpu_custom_call.1} parent=1 // pred_check_branch
      %14 = sbr.rel (0) target = $region5
    $region4: #{tpu_custom_call.1} parent=1 // pred_region
      %s16 = ssub.s32 64, 64
      %17 = vsyncadd [#allocation4], %s16
      %s19 = sshll.u32 [#allocation3], 4
      %s20 = int_to_ptr.vmem [resolvable:$true] %s19
      %22 = dma.hbm_to_vmem [thread:$0]  %s0, 64, %s20, [#allocation4]
    $region5: #{tpu_custom_call.1} parent=1 // pred_fallthru
      _
    // Predicated region
    $region6: #{tpu_custom_call.1} parent=1 // pred_check
      _
    $region7: #{tpu_custom_call.1} parent=1 // pred_check_branch
      %24 = sbr.rel (0) target = $region9
    $region8: #{tpu_custom_call.1} parent=1 // pred_region
      %s26 = ssub.s32 1024, 1024
      %27 = vsyncadd [#allocation7], %s26
      %s28 = sshll.u32 [#allocation6], 4
      %s29 = int_to_ptr.vmem [resolvable:$true] %s28
      %34 = dma.hbm_to_vmem [thread:$0]  %s1, 1024, %s29, [#allocation7], 256, 256, 16
    $region9: #{tpu_custom_call.1} parent=1 // pred_fallthru
      _
    // Predicated region
    $region10: #{tpu_custom_call.1} parent=1 // pred_check
      _
    $region11: #{tpu_custom_call.1} parent=1 // pred_check_branch
      %36 = sbr.rel (0) target = $region13
    $region12: #{tpu_custom_call.1} parent=1 // pred_region
      _
    $region13: #{tpu_custom_call.1} parent=1 // pred_fallthru
      _
    // Predicated region
    $region14: #{tpu_custom_call.1} parent=1 // pred_check
      _
    $region15: #{tpu_custom_call.1} parent=1 // pred_check_branch
      %38 = sbr.rel (0) target = $region17
    $region16: #{tpu_custom_call.1} parent=1 // pred_region
      %s40 = ssub.s32 256, 256
      %41 = vsyncadd [#allocation7], %s40
      %s43 = sshll.u32 [#allocation8], 4
      %s44 = int_to_ptr.vmem [resolvable:$true] %s43
      %46 = dma.hbm_to_vmem [thread:$0]  %s3, 256, %s44, [#allocation7]
    $region17: #{tpu_custom_call.1} parent=1 // pred_fallthru
      _
    // Predicated region
    $region18: #{tpu_custom_call.1} parent=1 // pred_check
      _
    $region19: #{tpu_custom_call.1} parent=1 // pred_check_branch
      %48 = sbr.rel (0) target = $region21
    $region20: #{tpu_custom_call.1} parent=1 // pred_region
      _
    $region21: #{tpu_custom_call.1} parent=1 // pred_fallthru
      _
    // Predicated region
    $region22: #{tpu_custom_call.1} parent=1 // pred_check
      _
    $region23: #{tpu_custom_call.1} parent=1 // pred_check_branch
      %50 = sbr.rel (0) target = $region25
    $region24: #{tpu_custom_call.1} parent=1 // pred_region
      %51 = dma.done [#allocation4], 64
    $region25: #{tpu_custom_call.1} parent=1 // pred_fallthru
      _
    // Predicated region
    $region26: #{tpu_custom_call.1} parent=1 // pred_check
      _
    $region27: #{tpu_custom_call.1} parent=1 // pred_check_branch
      %53 = sbr.rel (0) target = $region29
    $region28: #{tpu_custom_call.1} parent=1 // pred_region
      %54 = dma.done [#allocation7], 1024
    $region29: #{tpu_custom_call.1} parent=1 // pred_fallthru
      _
    // Predicated region
    $region30: #{tpu_custom_call.1} parent=1 // pred_check
      _
    $region31: #{tpu_custom_call.1} parent=1 // pred_check_branch
      %56 = sbr.rel (0) target = $region33
    $region32: #{tpu_custom_call.1} parent=1 // pred_region
      %57 = dma.done [#allocation7], 256
    $region33: #{tpu_custom_call.1} parent=1 // pred_fallthru
      _
    %p59 = scmp.eq.s32.totalorder 0, 0
    // Predicated region
    $region34: #{tpu_custom_call.1} parent=1 // pred_check
      %p60 = pneg %p59
    $region35: #{tpu_custom_call.1} parent=1 // pred_check_branch
      %62 = sbr.rel (%p60) target = $region37
    $region36: #{tpu_custom_call.1} parent=1 // pred_region
      %vm63 = vcmask 261120
      %64 = vst.msk [vmem:[#allocation2] sm:$0xff] %vm63, 0.0
    $region37: #{tpu_custom_call.1} parent=1 // pred_fallthru
      _
    %v65 = vld [vmem:[#allocation3] sm:$0xf]
    %v66 = vunpack.c.l.bf16 %v65
    %v67 = vld [vmem:[#allocation2] sm:$0xff]
    %v68 = vadd.f32 %v66, 0.0
    %v69 = vadd.f32 %v67, %v68
    %vm70 = vcmask 261120
    %71 = vst.msk [vmem:[#allocation2] sm:$0xff] %vm70, %v69
    // Predicated region
    $region38: #{tpu_custom_call.1} parent=1 // pred_check
      %p72 = pneg %p59
    $region39: #{tpu_custom_call.1} parent=1 // pred_check_branch
      %74 = sbr.rel (%p72) target = $region41
    $region40: #{tpu_custom_call.1} parent=1 // pred_region
      %v75 = vld [vmem:[#allocation2] sm:$0xff]
      %v76 = vsel %vm70, %v75, 0.0
      %v77 = vrot.slane %v76, 4
      %v78 = vadd.f32 %v76, %v77
      %v79 = vrot.slane %v78, 2
      %v80 = vadd.f32 %v78, %v79
      %v81 = vrot.slane %v80, 1
      %v82 = vadd.f32 %v80, %v81
      %v83 = vpack.c.bf16 %v82, %v82
      %v84 = vld [vmem:[#allocation6] sm:$0xff]
      %v85 = vld [vmem:[#allocation6 + $0x8] sm:$0xff]
      %v86 = vld [vmem:[#allocation6 + $0x10] sm:$0xff]
      %v87 = vld [vmem:[#allocation6 + $0x18] sm:$0xff]
      %v88 = vld [vmem:[#allocation6 + $0x20] sm:$0xff]
      %v89 = vld [vmem:[#allocation6 + $0x28] sm:$0xff]
      %v90 = vld [vmem:[#allocation6 + $0x30] sm:$0xff]
      %v91 = vld [vmem:[#allocation6 + $0x38] sm:$0xff]
      %v92 = vld [vmem:[%s2] sm:$0xf]
      %v101 = vunpack.c.l.b16 %v84
      %v102 = vunpack.c.h.b16 %v84
      %v103 = vunpack.c.l.b16 %v85
      %v104 = vunpack.c.h.b16 %v85
      %v105 = vunpack.c.l.b16 %v86
      %v106 = vunpack.c.h.b16 %v86
      %v107 = vunpack.c.l.b16 %v87
      %v108 = vunpack.c.h.b16 %v87
      %v109 = vunpack.c.l.b16 %v88
      %v110 = vunpack.c.h.b16 %v88
      %v111 = vunpack.c.l.b16 %v89
      %v112 = vunpack.c.h.b16 %v89
      %v113 = vunpack.c.l.b16 %v90
      %v114 = vunpack.c.h.b16 %v90
      %v115 = vunpack.c.l.b16 %v91
      %v116 = vunpack.c.h.b16 %v91
      %v117 = vpack.c.b16 %v105, %v101
      %v118 = vpack.c.b16 %v106, %v102
      %v119 = vpack.c.b16 %v107, %v103
      %v120 = vpack.c.b16 %v108, %v104
      %v121 = vpack.c.b16 %v113, %v109
      %v122 = vpack.c.b16 %v114, %v110
      %v123 = vpack.c.b16 %v115, %v111
      %v124 = vpack.c.b16 %v116, %v112
      %v134 = vlaneseq
      %v135 = vshrl.u32 %v134, 7
      %v136 = vsub.s32 0, %v135
      %v137 = vrot.slane %v92, %v136
      %v138 = vlaneseq
      %v139 = vshrl.u32 %v138, 7
      %v140 = vsub.s32 1, %v139
      %v141 = vrot.slane %v92, %v140
      %v142 = vlaneseq
      %v143 = vshrl.u32 %v142, 7
      %v144 = vsub.s32 2, %v143
      %v145 = vrot.slane %v92, %v144
      %v146 = vlaneseq
      %v147 = vshrl.u32 %v146, 7
      %v148 = vsub.s32 3, %v147
      %v149 = vrot.slane %v92, %v148
      %v155 = vsel %vm70, %v83, 0
      %157 = vmatprep.subr.bf16.mxu0 %v118
      %158 = vmatpush1.bf16.msra.mxu0 %v117
      %159 = vmatprep.subr.bf16.mxu0 %v122
      %160 = vmatpush1.bf16.msra.mxu0 %v121
      %161 = vmatprep.subr.bf16.mxu0 0
      %162 = vmatpush1.bf16.msra.mxu0 0
      %163 = vmatprep.subr.bf16.mxu0 0
      %164 = vmatpush1.bf16.msra.mxu0 0
      %165 = vmatprep.subr.bf16.mxu0 0
      %166 = vmatpush1.bf16.msra.mxu0 0
      %167 = vmatprep.subr.bf16.mxu0 0
      %168 = vmatpush1.bf16.msra.mxu0 0
      %169 = vmatprep.subr.bf16.mxu0 0
      %170 = vmatpush1.bf16.msra.mxu0 0
      %171 = vmatprep.subr.bf16.mxu0 0
      %172 = vmatpush1.bf16.msra.mxu0 0
      %173 = vmatprep.subr.bf16.mxu0 0
      %174 = vmatpush1.bf16.msra.mxu0 0
      %175 = vmatprep.subr.bf16.mxu0 0
      %176 = vmatpush1.bf16.msra.mxu0 0
      %177 = vmatprep.subr.bf16.mxu0 0
      %178 = vmatpush1.bf16.msra.mxu0 0
      %179 = vmatprep.subr.bf16.mxu0 0
      %180 = vmatpush1.bf16.msra.mxu0 0
      %181 = vmatprep.subr.bf16.mxu0 0
      %182 = vmatpush1.bf16.msra.mxu0 0
      %183 = vmatprep.subr.bf16.mxu0 0
      %184 = vmatpush1.bf16.msra.mxu0 0
      %185 = vmatprep.subr.bf16.mxu0 0
      %186 = vmatpush1.bf16.msra.mxu0 0
      %187 = vmatprep.subr.bf16.mxu0 0
      %188 = vmatpush1.bf16.msra.mxu0 0
      %189 = vmatprep.mubr.bf16.mxu0 0
      %190 = vmatmul.mubr.bf16.gmra.mrb[0].mxu0 %v155
      %v191 = vpop.f32.mrb[0].mxu0
      %v192 = vadd.f32 %v137, %v191
      %v193 = vpop.f32.mrb[0].mxu0
      %v194 = vadd.f32 %v141, %v193
      %v195 = vpop.f32.mrb[0].mxu0
      %v196 = vpop.f32.mrb[0].mxu0
      %197 = vdwg.mxu0
      %198 = vmatprep.subr.bf16.mxu0 %v120
      %199 = vmatpush1.bf16.msra.mxu0 %v119
      %200 = vmatprep.subr.bf16.mxu0 %v124
      %201 = vmatpush1.bf16.msra.mxu0 %v123
      %202 = vmatprep.subr.bf16.mxu0 0
      %203 = vmatpush1.bf16.msra.mxu0 0
      %204 = vmatprep.subr.bf16.mxu0 0
      %205 = vmatpush1.bf16.msra.mxu0 0
      %206 = vmatprep.subr.bf16.mxu0 0
      %207 = vmatpush1.bf16.msra.mxu0 0
      %208 = vmatprep.subr.bf16.mxu0 0
      %209 = vmatpush1.bf16.msra.mxu0 0
      %210 = vmatprep.subr.bf16.mxu0 0
      %211 = vmatpush1.bf16.msra.mxu0 0
      %212 = vmatprep.subr.bf16.mxu0 0
      %213 = vmatpush1.bf16.msra.mxu0 0
      %214 = vmatprep.subr.bf16.mxu0 0
      %215 = vmatpush1.bf16.msra.mxu0 0
      %216 = vmatprep.subr.bf16.mxu0 0
      %217 = vmatpush1.bf16.msra.mxu0 0
      %218 = vmatprep.subr.bf16.mxu0 0
      %219 = vmatpush1.bf16.msra.mxu0 0
      %220 = vmatprep.subr.bf16.mxu0 0
      %221 = vmatpush1.bf16.msra.mxu0 0
      %222 = vmatprep.subr.bf16.mxu0 0
      %223 = vmatpush1.bf16.msra.mxu0 0
      %224 = vmatprep.subr.bf16.mxu0 0
      %225 = vmatpush1.bf16.msra.mxu0 0
      %226 = vmatprep.subr.bf16.mxu0 0
      %227 = vmatpush1.bf16.msra.mxu0 0
      %228 = vmatprep.subr.bf16.mxu0 0
      %229 = vmatpush1.bf16.msra.mxu0 0
      %230 = vmatprep.mubr.bf16.mxu0 0
      %231 = vmatmul.mubr.bf16.gmra.mrb[0].mxu0 %v155
      %v232 = vpop.f32.mrb[0].mxu0
      %v233 = vadd.f32 %v145, %v232
      %v234 = vpop.f32.mrb[0].mxu0
      %v235 = vadd.f32 %v149, %v234
      %v236 = vpop.f32.mrb[0].mxu0
      %v237 = vpop.f32.mrb[0].mxu0
      %238 = vdwg.mxu0
      %v239 = vmax.f32 %v192, 0.0
      %v240 = vmax.f32 %v194, 0.0
      %v241 = vmax.f32 %v233, 0.0
      %v242 = vmax.f32 %v235, 0.0
      %v243 = vpack.c.bf16 %v239, %v239
      %v244 = vpack.c.bf16 %v240, %v240
      %v245 = vpack.c.bf16 %v241, %v241
      %v246 = vpack.c.bf16 %v242, %v242
      %v247 = vld [vmem:[#allocation8] sm:$0xff]
      %v248 = vld [vmem:[#allocation8 + $0x8] sm:$0xff]
      %v249 = vld [vmem:[%s4] sm:$0x1]
      %v252 = vunpack.c.l.b16 %v247
      %v253 = vunpack.c.h.b16 %v247
      %v254 = vunpack.c.l.b16 %v248
      %v255 = vunpack.c.h.b16 %v248
      %v256 = vpack.c.b16 %v252, %v252
      %v257 = vpack.c.b16 %v253, %v253
      %v258 = vpack.c.b16 %v254, %v254
      %v259 = vpack.c.b16 %v255, %v255
      %264 = vmatprep.subr.bf16.mxu0 %v257
      %265 = vmatpush1.bf16.xpose.msra.mxu0 %v256
      %266 = vmatprep.subr.bf16.mxu0 0
      %267 = vmatpush1.bf16.xpose.msra.mxu0 0
      %268 = vmatprep.subr.bf16.mxu0 0
      %269 = vmatpush1.bf16.xpose.msra.mxu0 0
      %270 = vmatprep.subr.bf16.mxu0 0
      %271 = vmatpush1.bf16.xpose.msra.mxu0 0
      %272 = vmatprep.subr.bf16.mxu0 0
      %273 = vmatpush1.bf16.xpose.msra.mxu0 0
      %274 = vmatprep.subr.bf16.mxu0 0
      %275 = vmatpush1.bf16.xpose.msra.mxu0 0
      %276 = vmatprep.subr.bf16.mxu0 0
      %277 = vmatpush1.bf16.xpose.msra.mxu0 0
      %278 = vmatprep.subr.bf16.mxu0 0
      %279 = vmatpush1.bf16.xpose.msra.mxu0 0
      %280 = vmatprep.subr.bf16.mxu0 0
      %281 = vmatpush1.bf16.xpose.msra.mxu0 0
      %282 = vmatprep.subr.bf16.mxu0 0
      %283 = vmatpush1.bf16.xpose.msra.mxu0 0
      %284 = vmatprep.subr.bf16.mxu0 0
      %285 = vmatpush1.bf16.xpose.msra.mxu0 0
      %286 = vmatprep.subr.bf16.mxu0 0
      %287 = vmatpush1.bf16.xpose.msra.mxu0 0
      %288 = vmatprep.subr.bf16.mxu0 0
      %289 = vmatpush1.bf16.xpose.msra.mxu0 0
      %290 = vmatprep.subr.bf16.mxu0 0
      %291 = vmatpush1.bf16.xpose.msra.mxu0 0
      %292 = vmatprep.subr.bf16.mxu0 0
      %293 = vmatpush1.bf16.xpose.msra.mxu0 0
      %294 = vmatprep.subr.bf16.mxu0 0
      %295 = vmatpush1.bf16.xpose.msra.mxu0 0
      %296 = vmatprep.mubr.bf16.mxu0 %v244
      %297 = vmatmul.mubr.bf16.gmra.mrb[0].mxu0 %v243
      %v298 = vpop.f32.mrb[0].mxu0
      %v299 = vadd.f32 %v249, %v298
      %v300 = vpop.f32.mrb[0].mxu0
      %v301 = vpop.f32.mrb[0].mxu0
      %v302 = vpop.f32.mrb[0].mxu0
      %303 = vdwg.mxu0
      %304 = vmatprep.subr.bf16.mxu0 %v259
      %305 = vmatpush1.bf16.xpose.msra.mxu0 %v258
      %306 = vmatprep.subr.bf16.mxu0 0
      %307 = vmatpush1.bf16.xpose.msra.mxu0 0
      %308 = vmatprep.subr.bf16.mxu0 0
      %309 = vmatpush1.bf16.xpose.msra.mxu0 0
      %310 = vmatprep.subr.bf16.mxu0 0
      %311 = vmatpush1.bf16.xpose.msra.mxu0 0
      %312 = vmatprep.subr.bf16.mxu0 0
      %313 = vmatpush1.bf16.xpose.msra.mxu0 0
      %314 = vmatprep.subr.bf16.mxu0 0
      %315 = vmatpush1.bf16.xpose.msra.mxu0 0
      %316 = vmatprep.subr.bf16.mxu0 0
      %317 = vmatpush1.bf16.xpose.msra.mxu0 0
      %318 = vmatprep.subr.bf16.mxu0 0
      %319 = vmatpush1.bf16.xpose.msra.mxu0 0
      %320 = vmatprep.subr.bf16.mxu0 0
      %321 = vmatpush1.bf16.xpose.msra.mxu0 0
      %322 = vmatprep.subr.bf16.mxu0 0
      %323 = vmatpush1.bf16.xpose.msra.mxu0 0
      %324 = vmatprep.subr.bf16.mxu0 0
      %325 = vmatpush1.bf16.xpose.msra.mxu0 0
      %326 = vmatprep.subr.bf16.mxu0 0
      %327 = vmatpush1.bf16.xpose.msra.mxu0 0
      %328 = vmatprep.subr.bf16.mxu0 0
      %329 = vmatpush1.bf16.xpose.msra.mxu0 0
      %330 = vmatprep.subr.bf16.mxu0 0
      %331 = vmatpush1.bf16.xpose.msra.mxu0 0
      %332 = vmatprep.subr.bf16.mxu0 0
      %333 = vmatpush1.bf16.xpose.msra.mxu0 0
      %334 = vmatprep.subr.bf16.mxu0 0
      %335 = vmatpush1.bf16.xpose.msra.mxu0 0
      %336 = vmatprep.mubr.bf16.mxu0 %v246
      %337 = vmatmul.mubr.bf16.gmra.mrb[0].mxu0 %v245
      %v338 = vpop.f32.mrb[0].mxu0
      %v339 = vadd.f32 %v299, %v338
      %v340 = vpop.f32.mrb[0].mxu0
      %v341 = vpop.f32.mrb[0].mxu0
      %v342 = vpop.f32.mrb[0].mxu0
      %343 = vdwg.mxu0
      %vm344 = vcmask 57344
      %v345 = vsel %vm344, %v339, -inf
      %346 = vmax.xlane.f32.xlu0 %v345
      %v347 = vpop.xlane.xlu0 %346
      %v348 = vsub.f32 %v339, %v347
      %v349 = vmul.f32 %v348, 1.442695
      %v350 = vpow.pop %v349
      %v351 = vsel %vm344, %v350, 0.0
      %352 = vadd.xlane.f32.xlu0 %v351
      %v353 = vpop.xlane.xlu0 %352
      %v354 = vrcp.pop %v353
      %v355 = vmul.f32 %v350, %v354
      %356 = vst.msk [vmem:[#allocation9] sm:$0x1] %vm344, %v355
    $region41: #{tpu_custom_call.1} parent=1 // pred_fallthru
      _
    // Predicated region
    $region42: #{tpu_custom_call.1} parent=1 // pred_check
      _
    $region43: #{tpu_custom_call.1} parent=1 // pred_check_branch
      %358 = sbr.rel (0) target = $region45
    $region44: #{tpu_custom_call.1} parent=1 // pred_region
      %s360 = ssub.s32 16, 16
      %361 = vsyncadd [#allocation5], %s360
      %s363 = sshll.u32 [#allocation9], 4
      %s364 = int_to_ptr.vmem [resolvable:$true] %s363
      %366 = dma.vmem_to_hbm [thread:$0]  %s364, 16, %s5, [#allocation5]
    $region45: #{tpu_custom_call.1} parent=1 // pred_fallthru
      _
    // Predicated region
    $region46: #{tpu_custom_call.1} parent=1 // pred_check
      _
    $region47: #{tpu_custom_call.1} parent=1 // pred_check_branch
      %368 = sbr.rel (0) target = $region49
    $region48: #{tpu_custom_call.1} parent=1 // pred_region
      %369 = dma.done [#allocation5], 16
    $region49: #{tpu_custom_call.1} parent=1 // pred_fallthru
      _
    %370 = vsyncpa [#allocation4], 1
    %371 = vsyncpa [#allocation7], 1
    %372 = vsyncpa [#allocation5], 1

</llo_original>
